<compile_context>
chip_gen: v7x
topology: tpu7x:2x2x1
jax: 0.10.0
libtpu: 0.0.40
codegen_flags: <defaults>
</compile_context>

<pallas_src>
import functools
import math

import jax
import jax.numpy as jnp
from jax.experimental import pallas as pl
from jax.experimental.pallas import tpu as pltpu

LANE = 128                     # vreg lane width (last-dim padding target)
SUB = 8                        # f32 sublane count (second-to-last padding)
ROWS_PER_LAYER = 144           # 128 weight rows + 1 bias row + 15 zero rows
                               # (144 is a multiple of the bf16 sublane tile 16,
                               #  so every per-layer slice is tile-aligned)
MAX_TILE_B = 2048              # max batch rows per grid step
MIN_SPLIT_ROWS = 128           # only split into 2 tiles if each gets >= this


def _round_up(n, m):
    return (n + m - 1) // m * m


def _cdiv(a, b):
    return -(-a // b)


# ------------------------------ Pallas kernel -------------------------------

def _qnet_kernel(x_ref, p_ref, o_ref, h_scr, *, n_layers, in_features):
    """Fused MLP: relu(x@W1+b1) [-> relu(.@W2+b2)] -> .@Wn+bn.

    x_ref : (TB, in_features) f32      real-width activation tile
    p_ref : (n_layers*144, 128) bf16   packed params; per layer:
              rows [r0, r0+128)   = weight (in, out), zero-padded to 128x128
              row   r0+128        = bias (1, out), zero-padded to 128 lanes
              rows  r0+129..143   = zero padding (bf16 sublane alignment)
    o_ref : (TB, 128) f32              lane-dense output slab (pad lanes are 0)
    h_scr : (TB, 128) f32              VMEM staging for lane zero-extension
    """
    if in_features == LANE:
        h = x_ref[...]
    else:
        # Stage the narrow tile through VMEM to get a lane-dense (TB, 128)
        # activation, then mask the pad lanes to exactly zero. Masking (instead
        # of pre-zeroing the scratch on the first grid step) keeps this correct
        # even when grid steps are sharded across TensorCores, where a
        # "program_id == 0" init would never run on the second core.
        h_scr[:, pl.ds(0, in_features)] = x_ref[...]
        lane = jax.lax.broadcasted_iota(jnp.int32, h_scr.shape, 1)
        h = jnp.where(lane < in_features, h_scr[...], 0.0)

    for layer in range(n_layers):              # static Python loop -> unrolled
        r0 = layer * ROWS_PER_LAYER
        w = p_ref[pl.ds(r0, LANE), :]          # (128, 128) bf16 weight tile
        b = p_ref[pl.ds(r0 + LANE, 1), :]      # (1, 128)   bf16 bias row
        h = jnp.dot(h.astype(jnp.bfloat16), w,
                    preferred_element_type=jnp.float32)   # MXU, f32 accumulate
        h = h + b.astype(jnp.float32)
        if layer < n_layers - 1:
            h = jnp.maximum(h, 0.0)            # keep elementwise f32 (v5e VPU)
    o_ref[...] = h.astype(o_ref.dtype)


# ------------------------------ Python wrapper -------------------------------

@functools.partial(jax.jit, static_argnames=("output_size",))
def linear_qnet_forward(x, packed_params, *, output_size):
    """x: (batch, in_features) float; packed_params: (n_layers*144, 128) bf16."""
    batch, in_features = x.shape
    assert in_features <= LANE, "feature dim must fit in one 128-lane tile"
    n_layers = packed_params.shape[0] // ROWS_PER_LAYER

    # --- batch tiling: size tiles from the actual batch -----------------------
    num_tiles = _cdiv(batch, MAX_TILE_B)
    if num_tiles == 1 and batch >= 2 * MIN_SPLIT_ROWS:
        num_tiles = 2                          # let both v7x TCs work
    if num_tiles > 1 and num_tiles % 2:
        num_tiles += 1                         # even, equal tiles for megacore
    tb = _round_up(_cdiv(batch, num_tiles), SUB)
    b_pad = num_tiles * tb

    # Only a narrow, feature-width batch-row pad (no 128-lane slab round trip).
    x = x.astype(jnp.float32)
    if b_pad != batch:
        x = jnp.pad(x, ((0, b_pad - batch), (0, 0)))

    out = pl.pallas_call(
        functools.partial(_qnet_kernel, n_layers=n_layers,
                          in_features=in_features),
        out_shape=jax.ShapeDtypeStruct((b_pad, LANE), jnp.float32),
        grid=(num_tiles,),
        in_specs=[
            # x streamed per batch tile at its real feature width
            pl.BlockSpec((tb, in_features), lambda i: (i, 0)),
            # packed params resident across all batch tiles (constant index_map)
            pl.BlockSpec(packed_params.shape, lambda i: (0, 0)),
        ],
        out_specs=pl.BlockSpec((tb, LANE), lambda i: (i, 0)),   # lane-dense out
        scratch_shapes=[pltpu.VMEM((tb, LANE), jnp.float32)],
        compiler_params=pltpu.CompilerParams(
            dimension_semantics=("parallel",)),  # shard batch tiles across TCs
    )(x, packed_params)

    return out[:batch, :output_size]


# ------------------------ parameter init / packing ---------------------------

def _pack_params(layers):
    """Pack [(W(in,out), b(out)), ...] into one (n*144, 128) bf16 buffer."""
    for w, b in layers:
        assert w.shape[0] <= LANE and w.shape[1] <= LANE and b.shape[0] <= LANE
    buf = jnp.zeros((len(layers) * ROWS_PER_LAYER, LANE), jnp.bfloat16)
    for i, (w, b) in enumerate(layers):
        r0 = i * ROWS_PER_LAYER
        buf = buf.at[r0:r0 + w.shape[0], :w.shape[1]].set(w.astype(jnp.bfloat16))
        buf = buf.at[r0 + LANE, :b.shape[0]].set(b.astype(jnp.bfloat16))
    return buf


def init_linear_qnet(key, input_size, hidden1_size, hidden2_size, output_size):
    """PyTorch-style Linear init U(-1/sqrt(fan_in), +1/sqrt(fan_in)).
    Weights stored pre-transposed as (in, out). Returns (raw_layers, packed)."""
    def linear(k, fan_in, fan_out):
        kw, kb = jax.random.split(k)
        bound = 1.0 / math.sqrt(fan_in)
        w = jax.random.uniform(kw, (fan_in, fan_out), jnp.float32, -bound, bound)
        b = jax.random.uniform(kb, (fan_out,), jnp.float32, -bound, bound)
        return w, b

    if hidden2_size == 0:
        k1, k2 = jax.random.split(key, 2)
        layers = [linear(k1, input_size, hidden1_size),
                  linear(k2, hidden1_size, output_size)]
    else:
        k1, k2, k3 = jax.random.split(key, 3)
        layers = [linear(k1, input_size, hidden1_size),
                  linear(k2, hidden1_size, hidden2_size),
                  linear(k3, hidden2_size, output_size)]
    return layers, _pack_params(layers)


def _bf16_rounded(layers):
    """Reference params rounded through bf16 (matches the packed kernel weights)."""
    return [(w.astype(jnp.bfloat16).astype(jnp.float32),
             b.astype(jnp.bfloat16).astype(jnp.float32)) for w, b in layers]


def reference_forward(x, layers):
    h = x
    for i, (w, b) in enumerate(layers):
        h = h @ w + b
        if i < len(layers) - 1:
            h = jnp.maximum(h, 0.0)
    return h


# TODO(synk): save/load/save_checkPoints/load_checkPoints are file-I/O methods
# with no kernel equivalent; omitted.

# ----------------------------------- main ------------------------------------

if __name__ == "__main__":
    key = jax.random.PRNGKey(0)
    kx, kp3, kp2, kxl = jax.random.split(key, 4)

    # Snake-AI-like shapes: 11-d state, two hidden layers, 3 actions.
    batch, input_size, hidden1, hidden2, output_size = 4, 11, 32, 16, 3
    x = jax.random.normal(kx, (batch, input_size), jnp.float32)

    # --- 3-layer variant (hidden2_size != 0), small inference batch ---
    layers3, packed3 = init_linear_qnet(kp3, input_size, hidden1, hidden2,
                                        output_size)
    out3 = jax.block_until_ready(
        linear_qnet_forward(x, packed3, output_size=output_size))
    # Compare against the f32-math reference with bf16-rounded params; the only
    # remaining delta is the in-kernel bf16 activation rounding (<~1e-2).
    ref3 = reference_forward(x, _bf16_rounded(layers3))
    assert out3.shape == (batch, output_size)
    assert jnp.allclose(out3, ref3, atol=3e-2, rtol=3e-2)

    # --- 2-layer variant (hidden2_size == 0) ---
    layers2, packed2 = init_linear_qnet(kp2, input_size, hidden1, 0, output_size)
    out2 = jax.block_until_ready(
        linear_qnet_forward(x, packed2, output_size=output_size))
    ref2 = reference_forward(x, _bf16_rounded(layers2))
    assert out2.shape == (batch, output_size)
    assert jnp.allclose(out2, ref2, atol=3e-2, rtol=3e-2)

    # --- replay-buffer-sized batch exercises the 2 x 304 balanced tiling ---
    xl = jax.random.normal(kxl, (600, input_size), jnp.float32)
    outl = jax.block_until_ready(
        linear_qnet_forward(xl, packed3, output_size=output_size))
    refl = reference_forward(xl, _bf16_rounded(layers3))
    assert outl.shape == (600, output_size)
    assert jnp.allclose(outl, refl, atol=3e-2, rtol=3e-2)

    print("KERNEL_OK")
</pallas_src>

<mosaic_0001>
module attributes {stable_mosaic.version = 11 : i64} {
  func.func @_qnet_kernel(%arg0: i32, %arg1: memref<8x11xf32, #tpu.memory_space<vmem>>, %arg2: memref<432x128xbf16, #tpu.memory_space<vmem>>, %arg3: memref<8x128xf32, #tpu.memory_space<vmem>>, %arg4: memref<8x128xf32, #tpu.memory_space<vmem>>) attributes {dimension_semantics = [#tpu.dimension_semantics<parallel>], iteration_bounds = array<i64: 1>, scalar_prefetch = 0 : i64, scratch_operands = 1 : i64, tpu.core_type = #tpu.core_type<tc>, window_params = [{transform_indices = @transform_0, window_bounds = array<i64: 8, 11>}, {pipeline_mode = #tpu.pipeline_mode<synchronous>, transform_indices = @transform_1, window_bounds = array<i64: 432, 128>}, {transform_indices = @transform_2, window_bounds = array<i64: 8, 128>}]} {
    %c0 = arith.constant 0 : index
    %c0_0 = arith.constant 0 : index
    %0 = vector.load %arg1[%c0, %c0_0] : memref<8x11xf32, #tpu.memory_space<vmem>>, vector<8x11xf32>
    %c0_1 = arith.constant 0 : index
    %c0_2 = arith.constant 0 : index
    %1 = vector.load %arg4[%c0_1, %c0_2] : memref<8x128xf32, #tpu.memory_space<vmem>>, vector<8x11xf32>
    tpu.vector_store %arg4[%c0_1, %c0_2], %0 {strides = array<i32>} : memref<8x128xf32, #tpu.memory_space<vmem>>, vector<8x11xf32>,
    %2 = tpu.iota {dimensions = array<i32: 1>} : vector<8x128xi32>
    %c11_i32 = arith.constant 11 : i32
    %3 = vector.broadcast %c11_i32 : i32 to vector<8x128xi32>
    %4 = arith.cmpi slt, %2, %3 : vector<8x128xi32>
    %c0_3 = arith.constant 0 : index
    %c0_4 = arith.constant 0 : index
    %5 = vector.load %arg4[%c0_3, %c0_4] : memref<8x128xf32, #tpu.memory_space<vmem>>, vector<8x128xf32>
    %cst = arith.constant 0.000000e+00 : f32
    %6 = vector.broadcast %cst : f32 to vector<8x128xf32>
    %7 = arith.select %4, %5, %6 : vector<8x128xi1>, vector<8x128xf32>
    %c0_5 = arith.constant 0 : index
    %c0_6 = arith.constant 0 : index
    %8 = vector.load %arg2[%c0_5, %c0_6] : memref<432x128xbf16, #tpu.memory_space<vmem>>, vector<128x128xbf16>
    %c128 = arith.constant 128 : index
    %c0_7 = arith.constant 0 : index
    %9 = vector.load %arg2[%c128, %c0_7] : memref<432x128xbf16, #tpu.memory_space<vmem>>, vector<1x128xbf16>
    %10 = arith.truncf %7 : vector<8x128xf32> to vector<8x128xbf16>
    %cst_8 = arith.constant dense<0.000000e+00> : vector<8x128xf32>
    %11 = tpu.matmul %10, %8, %cst_8 {dimension_numbers = #tpu.dot_dimension_numbers<[1], [0], [0], [1], [0, 0, 1, 1], [], []>} : vector<8x128xbf16>, vector<128x128xbf16>, vector<8x128xf32> -> vector<8x128xf32>
    %12 = arith.extf %9 : vector<1x128xbf16> to vector<1x128xf32>
    %13 = vector.broadcast %12 : vector<1x128xf32> to vector<8x128xf32>
    %14 = arith.addf %11, %13 : vector<8x128xf32>
    %cst_9 = arith.constant 0.000000e+00 : f32
    %15 = vector.broadcast %cst_9 : f32 to vector<8x128xf32>
    %16 = arith.maximumf %14, %15 : vector<8x128xf32>
    %c144 = arith.constant 144 : index
    %c0_10 = arith.constant 0 : index
    %17 = vector.load %arg2[%c144, %c0_10] : memref<432x128xbf16, #tpu.memory_space<vmem>>, vector<128x128xbf16>
    %c272 = arith.constant 272 : index
    %c0_11 = arith.constant 0 : index
    %18 = vector.load %arg2[%c272, %c0_11] : memref<432x128xbf16, #tpu.memory_space<vmem>>, vector<1x128xbf16>
    %19 = arith.truncf %16 : vector<8x128xf32> to vector<8x128xbf16>
    %cst_12 = arith.constant dense<0.000000e+00> : vector<8x128xf32>
    %20 = tpu.matmul %19, %17, %cst_12 {dimension_numbers = #tpu.dot_dimension_numbers<[1], [0], [0], [1], [0, 0, 1, 1], [], []>} : vector<8x128xbf16>, vector<128x128xbf16>, vector<8x128xf32> -> vector<8x128xf32>
    %21 = arith.extf %18 : vector<1x128xbf16> to vector<1x128xf32>
    %22 = vector.broadcast %21 : vector<1x128xf32> to vector<8x128xf32>
    %23 = arith.addf %20, %22 : vector<8x128xf32>
    %cst_13 = arith.constant 0.000000e+00 : f32
    %24 = vector.broadcast %cst_13 : f32 to vector<8x128xf32>
    %25 = arith.maximumf %23, %24 : vector<8x128xf32>
    %c288 = arith.constant 288 : index
    %c0_14 = arith.constant 0 : index
    %26 = vector.load %arg2[%c288, %c0_14] : memref<432x128xbf16, #tpu.memory_space<vmem>>, vector<128x128xbf16>
    %c416 = arith.constant 416 : index
    %c0_15 = arith.constant 0 : index
    %27 = vector.load %arg2[%c416, %c0_15] : memref<432x128xbf16, #tpu.memory_space<vmem>>, vector<1x128xbf16>
    %28 = arith.truncf %25 : vector<8x128xf32> to vector<8x128xbf16>
    %cst_16 = arith.constant dense<0.000000e+00> : vector<8x128xf32>
    %29 = tpu.matmul %28, %26, %cst_16 {dimension_numbers = #tpu.dot_dimension_numbers<[1], [0], [0], [1], [0, 0, 1, 1], [], []>} : vector<8x128xbf16>, vector<128x128xbf16>, vector<8x128xf32> -> vector<8x128xf32>
    %30 = arith.extf %27 : vector<1x128xbf16> to vector<1x128xf32>
    %31 = vector.broadcast %30 : vector<1x128xf32> to vector<8x128xf32>
    %32 = arith.addf %29, %31 : vector<8x128xf32>
    %c0_17 = arith.constant 0 : index
    %c0_18 = arith.constant 0 : index
    %33 = vector.load %arg3[%c0_17, %c0_18] : memref<8x128xf32, #tpu.memory_space<vmem>>, vector<8x128xf32>
    tpu.vector_store %arg3[%c0_17, %c0_18], %32 {strides = array<i32>} : memref<8x128xf32, #tpu.memory_space<vmem>>, vector<8x128xf32>,
    return
  }
  func.func @transform_0(%arg0: i32) -> (i32, i32) {
    %c0_i32 = arith.constant 0 : i32
    %c0_i32_0 = arith.constant 0 : i32
    return %arg0, %c0_i32 : i32, i32
  }
  func.func @transform_1(%arg0: i32) -> (i32, i32) {
    %c0_i32 = arith.constant 0 : i32
    %c0_i32_0 = arith.constant 0 : i32
    %c0_i32_1 = arith.constant 0 : i32
    return %c0_i32, %c0_i32_0 : i32, i32
  }
  func.func @transform_2(%arg0: i32) -> (i32, i32) {
    %c0_i32 = arith.constant 0 : i32
    %c0_i32_0 = arith.constant 0 : i32
    return %arg0, %c0_i32 : i32, i32
  }
}

</mosaic_0001>

<llo_original>
// kernel: linear_qnet_forward.1
$region0: #{linear_qnet_forward.1}
  #allocation0 [shape = 'u32[]', space=smem, size = 0x4, offset = 0x4, fixed_abs, tag = 'smem constant byte address 0x4 - core index']
  #allocation1 [shape = 'u32[144,128]{1,0:T(1,128)}', space=vmem, size = 0x12000, scoped, tag = 'internal scratch']
  #allocation2 [shape = 'f32[8,128]{1,0:T(8,128)}', space=vmem, size = 0x1000, scoped, tag = 'scratch operand']
  %s0 = inlined_call_operand.vmem [shape: f32[8,11], index: 0, kind: input, shape index: {}]
  %s1 = inlined_call_operand.hbm [shape: bf16[432,128], index: 1, kind: input, shape index: {}]
  %s2 = inlined_call_operand.vmem [shape: f32[8,128], index: 2, kind: output, shape index: {}]
  %s3 = sld [smem:[#allocation0]]
  $region22: #{linear_qnet_forward.1} parent=0
    _
  %s5 = ssub.s32 1, %s3
  %s6 = scalar_select 0, %s5, %s3
  $region1: #{linear_qnet_forward.1} parent=0
    #allocation3 [shape = 'u8[110592]{0}', space=vmem, size = 0x1b000, scoped, tag = 'input window, operand 1, single buffered']
    #allocation4 [shape = 's32[1]{0}', space=sflag, size = 0x4, scoped, tag = 'scoped memory for linear_qnet_forward.1']
    %7 = vsyncpa [#allocation4], 0
    // Predicated region
    $region2: #{linear_qnet_forward.1} parent=1 // pred_check
      _
    $region3: #{linear_qnet_forward.1} parent=1 // pred_check_branch
      %9 = sbr.rel (0) target = $region5
    $region4: #{linear_qnet_forward.1} parent=1 // pred_region
      _
    $region5: #{linear_qnet_forward.1} parent=1 // pred_fallthru
      _
    // Predicated region
    $region6: #{linear_qnet_forward.1} parent=1 // pred_check
      _
    $region7: #{linear_qnet_forward.1} parent=1 // pred_check_branch
      %11 = sbr.rel (0) target = $region9
    $region8: #{linear_qnet_forward.1} parent=1 // pred_region
      %s13 = ssub.s32 3456, 3456
      %14 = vsyncadd [#allocation4], %s13
      %s15 = sshll.u32 [#allocation3], 4
      %s16 = int_to_ptr.vmem [resolvable:$true] %s15
      %21 = dma.hbm_to_vmem [thread:$0]  %s1, 3456, %s16, [#allocation4], 64, 64, 4
    $region9: #{linear_qnet_forward.1} parent=1 // pred_fallthru
      _
    // Predicated region
    $region10: #{linear_qnet_forward.1} parent=1 // pred_check
      _
    $region11: #{linear_qnet_forward.1} parent=1 // pred_check_branch
      %23 = sbr.rel (0) target = $region13
    $region12: #{linear_qnet_forward.1} parent=1 // pred_region
      %24 = dma.done [#allocation4], 3456
    $region13: #{linear_qnet_forward.1} parent=1 // pred_fallthru
      _
    %v26 = vld [vmem:[%s0] sm:$0xff]
    %vm27 = vcmask 89088
    %28 = vst.msk [vmem:[#allocation2] sm:$0xff] %vm27, %v26
    %v29 = vlaneseq
    %v30 = vand.u32 %v29, 127
    %vm31 = vcmp.lt.s32.totalorder %v30, 11
    %v32 = vld [vmem:[#allocation2] sm:$0xff]
    %v33 = vsel %vm31, %v32, 0.0
    %v34 = vld [vmem:[#allocation3] sm:$0xf]
    %v35 = vld [vmem:[#allocation3 + $0x4] sm:$0xf]
    %v36 = vld [vmem:[#allocation3 + $0x8] sm:$0xf]
    %v37 = vld [vmem:[#allocation3 + $0xc] sm:$0xf]
    %v38 = vld [vmem:[#allocation3 + $0x10] sm:$0xf]
    %v39 = vld [vmem:[#allocation3 + $0x14] sm:$0xf]
    %v40 = vld [vmem:[#allocation3 + $0x18] sm:$0xf]
    %v41 = vld [vmem:[#allocation3 + $0x1c] sm:$0xf]
    %v42 = vld [vmem:[#allocation3 + $0x20] sm:$0xf]
    %v43 = vld [vmem:[#allocation3 + $0x24] sm:$0xf]
    %v44 = vld [vmem:[#allocation3 + $0x28] sm:$0xf]
    %v45 = vld [vmem:[#allocation3 + $0x2c] sm:$0xf]
    %v46 = vld [vmem:[#allocation3 + $0x30] sm:$0xf]
    %v47 = vld [vmem:[#allocation3 + $0x34] sm:$0xf]
    %v48 = vld [vmem:[#allocation3 + $0x38] sm:$0xf]
    %v49 = vld [vmem:[#allocation3 + $0x3c] sm:$0xf]
    %v50 = vld [vmem:[#allocation3 + $0x40] sm:$0x1]
    %v51 = vpack.c.bf16 %v33, %v33
    %v52 = vunpack.c.l.bf16 %v50
    %v53 = vlaneseq
    %v54 = vshrl.u32 %v53, 7
    %v55 = vsub.s32 0, %v54
    %v56 = vrot.slane %v52, %v55
    %v73 = vunpack.c.l.b16 %v34
    %v74 = vunpack.c.l.b16 %v35
    %v75 = vunpack.c.l.b16 %v36
    %v76 = vunpack.c.l.b16 %v37
    %v77 = vunpack.c.l.b16 %v38
    %v78 = vunpack.c.l.b16 %v39
    %v79 = vunpack.c.l.b16 %v40
    %v80 = vunpack.c.l.b16 %v41
    %v81 = vunpack.c.l.b16 %v42
    %v82 = vunpack.c.l.b16 %v43
    %v83 = vunpack.c.l.b16 %v44
    %v84 = vunpack.c.l.b16 %v45
    %v85 = vunpack.c.l.b16 %v46
    %v86 = vunpack.c.l.b16 %v47
    %v87 = vunpack.c.l.b16 %v48
    %v88 = vunpack.c.l.b16 %v49
    %v89 = vpack.c.b16 %v74, %v73
    %v90 = vpack.c.b16 %v76, %v75
    %v91 = vpack.c.b16 %v78, %v77
    %v92 = vpack.c.b16 %v80, %v79
    %v93 = vpack.c.b16 %v82, %v81
    %v94 = vpack.c.b16 %v84, %v83
    %v95 = vpack.c.b16 %v86, %v85
    %v96 = vpack.c.b16 %v88, %v87
    %105 = vmatprep.subr.bf16.mxu0 0
    %106 = vmatpush1.bf16.msra.mxu0 %v89
    %107 = vmatprep.subr.bf16.mxu0 0
    %108 = vmatpush1.bf16.msra.mxu0 %v90
    %109 = vmatprep.subr.bf16.mxu0 0
    %110 = vmatpush1.bf16.msra.mxu0 %v91
    %111 = vmatprep.subr.bf16.mxu0 0
    %112 = vmatpush1.bf16.msra.mxu0 %v92
    %113 = vmatprep.subr.bf16.mxu0 0
    %114 = vmatpush1.bf16.msra.mxu0 %v93
    %115 = vmatprep.subr.bf16.mxu0 0
    %116 = vmatpush1.bf16.msra.mxu0 %v94
    %117 = vmatprep.subr.bf16.mxu0 0
    %118 = vmatpush1.bf16.msra.mxu0 %v95
    %119 = vmatprep.subr.bf16.mxu0 0
    %120 = vmatpush1.bf16.msra.mxu0 %v96
    %121 = vmatprep.subr.bf16.mxu0 0
    %122 = vmatpush1.bf16.msra.mxu0 0
    %123 = vmatprep.subr.bf16.mxu0 0
    %124 = vmatpush1.bf16.msra.mxu0 0
    %125 = vmatprep.subr.bf16.mxu0 0
    %126 = vmatpush1.bf16.msra.mxu0 0
    %127 = vmatprep.subr.bf16.mxu0 0
    %128 = vmatpush1.bf16.msra.mxu0 0
    %129 = vmatprep.subr.bf16.mxu0 0
    %130 = vmatpush1.bf16.msra.mxu0 0
    %131 = vmatprep.subr.bf16.mxu0 0
    %132 = vmatpush1.bf16.msra.mxu0 0
    %133 = vmatprep.subr.bf16.mxu0 0
    %134 = vmatpush1.bf16.msra.mxu0 0
    %135 = vmatprep.subr.bf16.mxu0 0
    %136 = vmatpush1.bf16.msra.mxu0 0
    %137 = vmatprep.mubr.bf16.mxu0 0
    %138 = vmatmul.mubr.bf16.gmra.mrb[0].mxu0 %v51
    %v139 = vpop.f32.mrb[0].mxu0
    %v140 = vadd.f32 %v56, %v139
    %v141 = vpop.f32.mrb[0].mxu0
    %v142 = vpop.f32.mrb[0].mxu0
    %v143 = vpop.f32.mrb[0].mxu0
    %144 = vdwg.mxu0
    %v145 = vmax.f32 %v140, 0.0
    %v146 = vld [vmem:[#allocation3 + $0x48] sm:$0xf]
    %v147 = vld [vmem:[#allocation3 + $0x4c] sm:$0xf]
    %v148 = vld [vmem:[#allocation3 + $0x50] sm:$0xf]
    %v149 = vld [vmem:[#allocation3 + $0x54] sm:$0xf]
    %v150 = vld [vmem:[#allocation3 + $0x58] sm:$0xf]
    %v151 = vld [vmem:[#allocation3 + $0x5c] sm:$0xf]
    %v152 = vld [vmem:[#allocation3 + $0x60] sm:$0xf]
    %v153 = vld [vmem:[#allocation3 + $0x64] sm:$0xf]
    %v154 = vld [vmem:[#allocation3 + $0x68] sm:$0xf]
    %v155 = vld [vmem:[#allocation3 + $0x6c] sm:$0xf]
    %v156 = vld [vmem:[#allocation3 + $0x70] sm:$0xf]
    %v157 = vld [vmem:[#allocation3 + $0x74] sm:$0xf]
    %v158 = vld [vmem:[#allocation3 + $0x78] sm:$0xf]
    %v159 = vld [vmem:[#allocation3 + $0x7c] sm:$0xf]
    %v160 = vld [vmem:[#allocation3 + $0x80] sm:$0xf]
    %v161 = vld [vmem:[#allocation3 + $0x84] sm:$0xf]
    %v162 = vld [vmem:[#allocation3 + $0x88] sm:$0x1]
    %v163 = vpack.c.bf16 %v145, %v145
    %v164 = vunpack.c.l.bf16 %v162
    %v165 = vlaneseq
    %v166 = vshrl.u32 %v165, 7
    %v167 = vsub.s32 0, %v166
    %v168 = vrot.slane %v164, %v167
    %v185 = vunpack.c.l.b16 %v146
    %v186 = vunpack.c.l.b16 %v147
    %v187 = vunpack.c.l.b16 %v148
    %v188 = vunpack.c.l.b16 %v149
    %v189 = vunpack.c.l.b16 %v150
    %v190 = vunpack.c.l.b16 %v151
    %v191 = vunpack.c.l.b16 %v152
    %v192 = vunpack.c.l.b16 %v153
    %v193 = vunpack.c.l.b16 %v154
    %v194 = vunpack.c.l.b16 %v155
    %v195 = vunpack.c.l.b16 %v156
    %v196 = vunpack.c.l.b16 %v157
    %v197 = vunpack.c.l.b16 %v158
    %v198 = vunpack.c.l.b16 %v159
    %v199 = vunpack.c.l.b16 %v160
    %v200 = vunpack.c.l.b16 %v161
    %v201 = vpack.c.b16 %v186, %v185
    %v202 = vpack.c.b16 %v188, %v187
    %v203 = vpack.c.b16 %v190, %v189
    %v204 = vpack.c.b16 %v192, %v191
    %v205 = vpack.c.b16 %v194, %v193
    %v206 = vpack.c.b16 %v196, %v195
    %v207 = vpack.c.b16 %v198, %v197
    %v208 = vpack.c.b16 %v200, %v199
    %217 = vmatprep.subr.bf16.mxu0 0
    %218 = vmatpush1.bf16.msra.mxu0 %v201
    %219 = vmatprep.subr.bf16.mxu0 0
    %220 = vmatpush1.bf16.msra.mxu0 %v202
    %221 = vmatprep.subr.bf16.mxu0 0
    %222 = vmatpush1.bf16.msra.mxu0 %v203
    %223 = vmatprep.subr.bf16.mxu0 0
    %224 = vmatpush1.bf16.msra.mxu0 %v204
    %225 = vmatprep.subr.bf16.mxu0 0
    %226 = vmatpush1.bf16.msra.mxu0 %v205
    %227 = vmatprep.subr.bf16.mxu0 0
    %228 = vmatpush1.bf16.msra.mxu0 %v206
    %229 = vmatprep.subr.bf16.mxu0 0
    %230 = vmatpush1.bf16.msra.mxu0 %v207
    %231 = vmatprep.subr.bf16.mxu0 0
    %232 = vmatpush1.bf16.msra.mxu0 %v208
    %233 = vmatprep.subr.bf16.mxu0 0
    %234 = vmatpush1.bf16.msra.mxu0 0
    %235 = vmatprep.subr.bf16.mxu0 0
    %236 = vmatpush1.bf16.msra.mxu0 0
    %237 = vmatprep.subr.bf16.mxu0 0
    %238 = vmatpush1.bf16.msra.mxu0 0
    %239 = vmatprep.subr.bf16.mxu0 0
    %240 = vmatpush1.bf16.msra.mxu0 0
    %241 = vmatprep.subr.bf16.mxu0 0
    %242 = vmatpush1.bf16.msra.mxu0 0
    %243 = vmatprep.subr.bf16.mxu0 0
    %244 = vmatpush1.bf16.msra.mxu0 0
    %245 = vmatprep.subr.bf16.mxu0 0
    %246 = vmatpush1.bf16.msra.mxu0 0
    %247 = vmatprep.subr.bf16.mxu0 0
    %248 = vmatpush1.bf16.msra.mxu0 0
    %249 = vmatprep.mubr.bf16.mxu0 0
    %250 = vmatmul.mubr.bf16.gmra.mrb[0].mxu0 %v163
    %v251 = vpop.f32.mrb[0].mxu0
    %v252 = vadd.f32 %v168, %v251
    %v253 = vpop.f32.mrb[0].mxu0
    %v254 = vpop.f32.mrb[0].mxu0
    %v255 = vpop.f32.mrb[0].mxu0
    %256 = vdwg.mxu0
    %v257 = vmax.f32 %v252, 0.0
    %v258 = vld [vmem:[#allocation3 + $0x90] sm:$0xf]
    %v259 = vld [vmem:[#allocation3 + $0x94] sm:$0xf]
    %v260 = vld [vmem:[#allocation3 + $0x98] sm:$0xf]
    %v261 = vld [vmem:[#allocation3 + $0x9c] sm:$0xf]
    %v262 = vld [vmem:[#allocation3 + $0xa0] sm:$0xf]
    %v263 = vld [vmem:[#allocation3 + $0xa4] sm:$0xf]
    %v264 = vld [vmem:[#allocation3 + $0xa8] sm:$0xf]
    %v265 = vld [vmem:[#allocation3 + $0xac] sm:$0xf]
    %v266 = vld [vmem:[#allocation3 + $0xb0] sm:$0xf]
    %v267 = vld [vmem:[#allocation3 + $0xb4] sm:$0xf]
    %v268 = vld [vmem:[#allocation3 + $0xb8] sm:$0xf]
    %v269 = vld [vmem:[#allocation3 + $0xbc] sm:$0xf]
    %v270 = vld [vmem:[#allocation3 + $0xc0] sm:$0xf]
    %v271 = vld [vmem:[#allocation3 + $0xc4] sm:$0xf]
    %v272 = vld [vmem:[#allocation3 + $0xc8] sm:$0xf]
    %v273 = vld [vmem:[#allocation3 + $0xcc] sm:$0xf]
    %v274 = vld [vmem:[#allocation3 + $0xd0] sm:$0x1]
    %v275 = vpack.c.bf16 %v257, %v257
    %v276 = vunpack.c.l.bf16 %v274
    %v277 = vlaneseq
    %v278 = vshrl.u32 %v277, 7
    %v279 = vsub.s32 0, %v278
    %v280 = vrot.slane %v276, %v279
    %v297 = vunpack.c.l.b16 %v258
    %v298 = vunpack.c.l.b16 %v259
    %v299 = vunpack.c.l.b16 %v260
    %v300 = vunpack.c.l.b16 %v261
    %v301 = vunpack.c.l.b16 %v262
    %v302 = vunpack.c.l.b16 %v263
    %v303 = vunpack.c.l.b16 %v264
    %v304 = vunpack.c.l.b16 %v265
    %v305 = vunpack.c.l.b16 %v266
    %v306 = vunpack.c.l.b16 %v267
    %v307 = vunpack.c.l.b16 %v268
    %v308 = vunpack.c.l.b16 %v269
    %v309 = vunpack.c.l.b16 %v270
    %v310 = vunpack.c.l.b16 %v271
    %v311 = vunpack.c.l.b16 %v272
    %v312 = vunpack.c.l.b16 %v273
    %v313 = vpack.c.b16 %v298, %v297
    %v314 = vpack.c.b16 %v300, %v299
    %v315 = vpack.c.b16 %v302, %v301
    %v316 = vpack.c.b16 %v304, %v303
    %v317 = vpack.c.b16 %v306, %v305
    %v318 = vpack.c.b16 %v308, %v307
    %v319 = vpack.c.b16 %v310, %v309
    %v320 = vpack.c.b16 %v312, %v311
    %329 = vmatprep.subr.bf16.mxu0 0
    %330 = vmatpush1.bf16.msra.mxu0 %v313
    %331 = vmatprep.subr.bf16.mxu0 0
    %332 = vmatpush1.bf16.msra.mxu0 %v314
    %333 = vmatprep.subr.bf16.mxu0 0
    %334 = vmatpush1.bf16.msra.mxu0 %v315
    %335 = vmatprep.subr.bf16.mxu0 0
    %336 = vmatpush1.bf16.msra.mxu0 %v316
    %337 = vmatprep.subr.bf16.mxu0 0
    %338 = vmatpush1.bf16.msra.mxu0 %v317
    %339 = vmatprep.subr.bf16.mxu0 0
    %340 = vmatpush1.bf16.msra.mxu0 %v318
    %341 = vmatprep.subr.bf16.mxu0 0
    %342 = vmatpush1.bf16.msra.mxu0 %v319
    %343 = vmatprep.subr.bf16.mxu0 0
    %344 = vmatpush1.bf16.msra.mxu0 %v320
    %345 = vmatprep.subr.bf16.mxu0 0
    %346 = vmatpush1.bf16.msra.mxu0 0
    %347 = vmatprep.subr.bf16.mxu0 0
    %348 = vmatpush1.bf16.msra.mxu0 0
    %349 = vmatprep.subr.bf16.mxu0 0
    %350 = vmatpush1.bf16.msra.mxu0 0
    %351 = vmatprep.subr.bf16.mxu0 0
    %352 = vmatpush1.bf16.msra.mxu0 0
    %353 = vmatprep.subr.bf16.mxu0 0
    %354 = vmatpush1.bf16.msra.mxu0 0
    %355 = vmatprep.subr.bf16.mxu0 0
    %356 = vmatpush1.bf16.msra.mxu0 0
    %357 = vmatprep.subr.bf16.mxu0 0
    %358 = vmatpush1.bf16.msra.mxu0 0
    %359 = vmatprep.subr.bf16.mxu0 0
    %360 = vmatpush1.bf16.msra.mxu0 0
    %361 = vmatprep.mubr.bf16.mxu0 0
    %362 = vmatmul.mubr.bf16.gmra.mrb[0].mxu0 %v275
    %v363 = vpop.f32.mrb[0].mxu0
    %v364 = vadd.f32 %v280, %v363
    %v365 = vpop.f32.mrb[0].mxu0
    %v366 = vpop.f32.mrb[0].mxu0
    %v367 = vpop.f32.mrb[0].mxu0
    %368 = vdwg.mxu0
    %369 = vst [vmem:[%s2] sm:$0xff] %v364
    // Predicated region
    $region14: #{linear_qnet_forward.1} parent=1 // pred_check
      _
    $region15: #{linear_qnet_forward.1} parent=1 // pred_check_branch
      %371 = sbr.rel (0) target = $region17
    $region16: #{linear_qnet_forward.1} parent=1 // pred_region
      _
    $region17: #{linear_qnet_forward.1} parent=1 // pred_fallthru
      _
    // Predicated region
    $region18: #{linear_qnet_forward.1} parent=1 // pred_check
      _
    $region19: #{linear_qnet_forward.1} parent=1 // pred_check_branch
      %373 = sbr.rel (0) target = $region21
    $region20: #{linear_qnet_forward.1} parent=1 // pred_region
      _
    $region21: #{linear_qnet_forward.1} parent=1 // pred_fallthru
      _
    %374 = vsyncpa [#allocation4], 1

</llo_original>
